<compile_context>
chip_gen: v6e
topology: v6e:2x2x1
jax: 0.10.0
libtpu: 0.0.40
codegen_flags: <defaults>
</compile_context>

<pallas_src>
import functools
import math

import jax
import jax.numpy as jnp
from jax import lax
from jax.experimental import pallas as pl
from jax.experimental.pallas import tpu as pltpu

A_TALL, AA_TALL, B_TALL, BB_TALL = 64, 60, 128, 128   # stand-ins for 768, 720, 1280, 1280
_SLOPE = 0.1
_CONV_XBUF_BYTES = 8 * 1024 * 1024          # budget for the double-buffered halo window


def _default_vmem_limit():
    # Generation-aware scoped-VMEM limit: ~75% of physical, capped at 96 MiB,
    # with a 48 MiB fallback that is safe on v7x (64 MiB physical per TC).
    try:
        cap = int(pltpu.get_tpu_info().vmem_capacity_bytes)
        return min((cap * 3) // 4, 96 * 1024 * 1024)
    except Exception:
        return 48 * 1024 * 1024


_VMEM_LIMIT = _default_vmem_limit()


def _round_up(x, m):
    return ((x + m - 1) // m) * m


def _pad_cout(c):
    # Lane-dense stores for wide outputs; tiny outputs (2/16/32) stay unpadded so we
    # do not inflate HBM store bytes by up to 64x.
    if c % 128 == 0:
        return c
    if c >= 64:
        return _round_up(c, 128)
    return c


# ---------------------------------------------------------------------------
# Pallas kernel 1: fused-im2col stride-1 conv (+bias, +LeakyReLU)
# ---------------------------------------------------------------------------
def _conv_s1_kernel(w_ref, b_ref, x_hbm, o_ref, xbuf, sem,
                    *, TH, Wo, KH, KW, dil, relu, slope):
    # w_ref: (KH*KW, Cin, Cout_pad) bf16   b_ref: (1, Cout_pad) f32
    # x_hbm: (N, Hp, Wp, Cin) bf16 in HBM (ANY)   o_ref: (1, TH, Wo, Cout_pad) bf16
    # xbuf : VMEM (2, TH + dil*(KH-1), Wp, Cin) bf16   sem: DMA((2,))
    n = pl.program_id(0)
    blk = pl.program_id(1)
    n_blk = pl.num_programs(1)
    rows_in = TH + dil * (KH - 1)
    slot = blk % 2

    def fetch(bi, sl):
        pltpu.make_async_copy(x_hbm.at[n, pl.ds(bi * TH, rows_in)],
                              xbuf.at[sl], sem.at[sl]).start()

    @pl.when(blk == 0)
    def _():
        fetch(blk, slot)                       # prime the pipe for this batch element

    pltpu.make_async_copy(x_hbm.at[n, pl.ds(blk * TH, rows_in)],
                          xbuf.at[slot], sem.at[slot]).wait()

    @pl.when(blk + 1 < n_blk)
    def _():
        fetch(blk + 1, 1 - slot)               # prefetch next row block behind the MXU

    bias = b_ref[...]                          # (1, Cout_pad) f32

    @pl.loop(0, TH)
    def _(r):
        acc = None
        for ky in range(KH):
            for kx in range(KW):
                lhs = xbuf[slot, r + ky * dil, pl.ds(kx * dil, Wo), :]   # (Wo, Cin) bf16
                rhs = w_ref[ky * KW + kx]                                # (Cin, Cout_pad)
                d = jnp.dot(lhs, rhs, preferred_element_type=jnp.float32)
                acc = d if acc is None else acc + d
        acc = acc + bias
        if relu:
            acc = jnp.where(acc >= 0.0, acc, acc * slope)
        o_ref[0, r] = acc.astype(o_ref.dtype)


@functools.lru_cache(maxsize=None)
def _build_conv_s1(N, Hp, Wp, Cin, Cout_pad, KH, KW, dil, TH, n_rblk, relu):
    Wo = Wp - dil * (KW - 1)
    rows_in = TH + dil * (KH - 1)
    kernel = functools.partial(_conv_s1_kernel, TH=TH, Wo=Wo, KH=KH, KW=KW,
                               dil=dil, relu=relu, slope=_SLOPE)
    return pl.pallas_call(
        kernel,
        out_shape=jax.ShapeDtypeStruct((N, n_rblk * TH, Wo, Cout_pad), jnp.bfloat16),
        grid=(N, n_rblk),
        in_specs=[
            pl.BlockSpec((KH * KW, Cin, Cout_pad), lambda n, b: (0, 0, 0)),
            pl.BlockSpec((1, Cout_pad), lambda n, b: (0, 0)),
            pl.BlockSpec(memory_space=pl.ANY),     # activation stays in HBM, manual DMA
        ],
        out_specs=pl.BlockSpec((1, TH, Wo, Cout_pad), lambda n, b: (n, b, 0, 0)),
        scratch_shapes=[
            pltpu.VMEM((2, rows_in, Wp, Cin), jnp.bfloat16),
            pltpu.SemaphoreType.DMA((2,)),
        ],
        compiler_params=pltpu.CompilerParams(
            dimension_semantics=("parallel", "arbitrary"),
            vmem_limit_bytes=_VMEM_LIMIT),
    )


def _conv_stride1(xp, w_pt, bias, dil, relu):
    """xp: already spatially padded NHWC; w_pt: (Cout, Cin, KH, KW) PyTorch layout."""
    N, Hp, Wp, Cin = xp.shape
    Cout, _, KH, KW = w_pt.shape
    Ho = Hp - dil * (KH - 1)
    Wo = Wp - dil * (KW - 1)
    Cout_pad = _pad_cout(Cout)

    max_rows = max(1, _CONV_XBUF_BYTES // max(1, 4 * Wp * Cin) - dil * (KH - 1))
    TH = int(max(1, min(Ho, 16, max_rows)))
    n_rblk = -(-Ho // TH)
    need_rows = n_rblk * TH + dil * (KH - 1)
    if need_rows > Hp:
        xp = jnp.pad(xp, ((0, 0), (0, need_rows - Hp), (0, 0), (0, 0)))
    Hp2 = xp.shape[1]

    w_taps = jnp.transpose(w_pt, (2, 3, 1, 0)).reshape(KH * KW, Cin, Cout)
    if Cout_pad != Cout:
        w_taps = jnp.pad(w_taps, ((0, 0), (0, 0), (0, Cout_pad - Cout)))
        bias = jnp.pad(bias, (0, Cout_pad - Cout))

    fn = _build_conv_s1(N, Hp2, Wp, Cin, Cout_pad, KH, KW, dil, TH, n_rblk, relu)
    out = fn(w_taps.astype(jnp.bfloat16),
             bias.reshape(1, Cout_pad).astype(jnp.float32),
             xp.astype(jnp.bfloat16))
    return out[:, :Ho, :, :Cout]


# ---------------------------------------------------------------------------
# Pallas kernel 2: M/K tiled matmul + bias + LeakyReLU (stride-2 extractor convs)
# ---------------------------------------------------------------------------
def _mm_kernel(a_ref, w_ref, b_ref, o_ref, acc_ref, *, relu, slope):
    k = pl.program_id(2)

    @pl.when(k == 0)
    def _():
        acc_ref[...] = jnp.zeros_like(acc_ref)

    acc_ref[...] += jnp.dot(a_ref[0], w_ref[...], preferred_element_type=jnp.float32)

    @pl.when(k == pl.num_programs(2) - 1)
    def _():
        r = acc_ref[...] + b_ref[...]
        if relu:
            r = jnp.where(r >= 0.0, r, r * slope)
        o_ref[0] = r.astype(o_ref.dtype)


@functools.lru_cache(maxsize=None)
def _build_matmul(N, M_pad, K_pad, TM, TK, Cout_pad, relu):
    kernel = functools.partial(_mm_kernel, relu=relu, slope=_SLOPE)
    return pl.pallas_call(
        kernel,
        out_shape=jax.ShapeDtypeStruct((N, M_pad, Cout_pad), jnp.bfloat16),
        grid=(N, M_pad // TM, K_pad // TK),
        in_specs=[
            pl.BlockSpec((1, TM, TK), lambda n, m, k: (n, m, k)),
            pl.BlockSpec((TK, Cout_pad), lambda n, m, k: (k, 0)),
            pl.BlockSpec((1, Cout_pad), lambda n, m, k: (0, 0)),
        ],
        out_specs=pl.BlockSpec((1, TM, Cout_pad), lambda n, m, k: (n, m, 0)),
        scratch_shapes=[pltpu.VMEM((TM, Cout_pad), jnp.float32)],
        compiler_params=pltpu.CompilerParams(
            dimension_semantics=("parallel", "parallel", "arbitrary"),
            vmem_limit_bytes=_VMEM_LIMIT),
    )


def matmul_bias_act(A, Wm, bias, relu):
    """A: (N, M, K), Wm: (K, Cout), bias: (Cout,) -> (N, M, Cout) bf16."""
    N, M, K = A.shape
    Cout = Wm.shape[1]
    Cout_pad = _pad_cout(Cout)
    K_pad = _round_up(K, 128)
    TK = K_pad if K_pad <= 2048 else 512
    K_pad = _round_up(K_pad, TK)
    TM = 256 if M >= 256 else _round_up(M, 8)
    M_pad = _round_up(M, TM)

    A_p = jnp.pad(A, ((0, 0), (0, M_pad - M), (0, K_pad - K))).astype(jnp.bfloat16)
    W_p = jnp.pad(Wm, ((0, K_pad - K), (0, Cout_pad - Cout))).astype(jnp.bfloat16)
    b_p = jnp.pad(bias, (0, Cout_pad - Cout)).reshape(1, Cout_pad).astype(jnp.float32)
    out = _build_matmul(N, M_pad, K_pad, TM, TK, Cout_pad, relu)(A_p, W_p, b_p)
    return out[:, :M, :Cout]


# ---------------------------------------------------------------------------
# Pallas kernel 3: PWC correlation (81 displacements) + fused leaky_relu
# ---------------------------------------------------------------------------
def _corr_kernel(f_ref, s_ref, o_ref, *, TH, W, C, slope):
    # f_ref: (1, TH, W, C)  s_ref: (1, H+8, W+8, C)  o_ref: (1, 81, TH, W)
    blk = pl.program_id(1)
    f = f_ref[0].astype(jnp.float32)
    inv_c = 1.0 / float(C)
    base = blk * TH
    # TODO(synk): the 81 lane-axis reductions run on the XLU; an MXU formulation
    # (C-contraction dot) would offload them, at the cost of a layout transpose.
    for dy in range(9):
        for dx in range(9):
            s = s_ref[0, pl.ds(base + dy, TH), pl.ds(dx, W), :].astype(jnp.float32)
            v = jnp.sum(f * s, axis=-1) * inv_c
            v = jnp.where(v >= 0.0, v, v * slope)
            o_ref[0, dy * 9 + dx] = v.astype(o_ref.dtype)


def _corr_th(H):
    if H <= 64:
        return H
    for t in (32, 16, 8):
        if H % t == 0:
            return t
    return H


@functools.lru_cache(maxsize=None)
def _build_corr(N, H, W, C, TH):
    kernel = functools.partial(_corr_kernel, TH=TH, W=W, C=C, slope=_SLOPE)
    return pl.pallas_call(
        kernel,
        out_shape=jax.ShapeDtypeStruct((N, 81, H, W), jnp.bfloat16),
        grid=(N, H // TH),
        in_specs=[
            pl.BlockSpec((1, TH, W, C), lambda n, b: (n, b, 0, 0)),
            pl.BlockSpec((1, H + 8, W + 8, C), lambda n, b: (n, 0, 0, 0)),
        ],
        out_specs=pl.BlockSpec((1, 81, TH, W), lambda n, b: (n, 0, b, 0)),
        compiler_params=pltpu.CompilerParams(
            dimension_semantics=("parallel", "parallel"),
            vmem_limit_bytes=_VMEM_LIMIT),
    )


def correlation_nhwc(first, second):
    """PWC correlation (max displacement 4, 81 channels) + leaky_relu.  NHWC in/out."""
    N, H, W, C = first.shape
    TH = _corr_th(H)
    second_p = jnp.pad(second.astype(jnp.bfloat16), ((0, 0), (4, 4), (4, 4), (0, 0)))
    out = _build_corr(N, H, W, C, TH)(first.astype(jnp.bfloat16), second_p)
    return jnp.transpose(out, (0, 2, 3, 1))          # (N, H, W, 81) bf16


# ---------------------------------------------------------------------------
# Conv wrappers
# ---------------------------------------------------------------------------
def conv2d(x, w, b, stride=1, padding=1, dilation=1, relu=True):
    xp = jnp.pad(x, ((0, 0), (padding, padding), (padding, padding), (0, 0)))
    if stride == 1:
        return _conv_stride1(xp, w, b, dilation, relu)

    # stride-2 extractor convs: small-K im2col + tiled Pallas matmul
    N, Hp, Wp, Cin = xp.shape
    Cout, _, KH, KW = w.shape
    Ho = (Hp - KH) // stride + 1
    Wo = (Wp - KW) // stride + 1
    cols = []
    for ky in range(KH):
        for kx in range(KW):
            cols.append(xp[:, ky:ky + stride * (Ho - 1) + 1:stride,
                           kx:kx + stride * (Wo - 1) + 1:stride, :])
    A = jnp.concatenate(cols, axis=-1).reshape(N, Ho * Wo, KH * KW * Cin)
    Wm = jnp.transpose(w, (2, 3, 1, 0)).reshape(KH * KW * Cin, Cout)
    out = matmul_bias_act(A, Wm, b, relu)
    return out.reshape(N, Ho, Wo, Cout)


def conv_transpose2d(x, w, b):
    """ConvTranspose2d(k=4, s=2, p=1).  x NHWC, w: (Cin, Cout, 4, 4) PyTorch layout."""
    zero = jnp.zeros((), x.dtype)
    # interior zero-pad (stride-2 upsample) + spatial pad of 2 in one lax.pad
    xp = lax.pad(x, zero, ((0, 0, 0), (2, 2, 1), (2, 2, 1), (0, 0, 0)))
    we = jnp.transpose(jnp.flip(w, axis=(2, 3)), (1, 0, 2, 3))    # (Cout, Cin, 4, 4)
    return _conv_stride1(xp, we, b, dil=1, relu=False)


# ---------------------------------------------------------------------------
# Plain-JAX glue: bilinear resize (align_corners=False) and Backward warp
# ---------------------------------------------------------------------------
def interpolate_bilinear_nchw(x, size):
    N, C, H, W = x.shape
    Ho, Wo = size

    def src_idx(out_s, in_s):
        scale = in_s / out_s
        s = jnp.maximum((jnp.arange(out_s, dtype=jnp.float32) + 0.5) * scale - 0.5, 0.0)
        i0 = jnp.minimum(jnp.floor(s).astype(jnp.int32), in_s - 1)
        i1 = jnp.minimum(i0 + 1, in_s - 1)
        frac = s - i0.astype(jnp.float32)
        return i0, i1, frac

    y0, y1, wy = src_idx(Ho, H)
    x0, x1, wx = src_idx(Wo, W)
    top = jnp.take(x, y0, axis=2)
    bot = jnp.take(x, y1, axis=2)

    def lerp_w(t):
        l = jnp.take(t, x0, axis=3)
        r = jnp.take(t, x1, axis=3)
        return l * (1.0 - wx) + r * wx

    t = lerp_w(top)
    bt = lerp_w(bot)
    return t * (1.0 - wy[:, None]) + bt * wy[:, None]


def backward_warp_nhwc(inp, flow, factor=1.0):
    """Equivalent of the PyTorch Backward() (grid_sample bilinear, border padding)."""
    inp = inp.astype(jnp.float32)
    flow = flow.astype(jnp.float32)
    N, H, W, C = inp.shape
    Hf, Wf = flow.shape[1], flow.shape[2]
    gx = jnp.linspace(-1.0, 1.0, Wf)
    gy = jnp.linspace(-1.0, 1.0, Hf)
    fx = flow[..., 0] / ((W - 1.0) / 2.0)
    fy = flow[..., 1] / ((H - 1.0) / 2.0)
    sx = gx[None, None, :] + fx * factor
    sy = gy[None, :, None] + fy * factor
    ix = (sx + 1.0) * W * 0.5 - 0.5       # align_corners=False un-normalization
    iy = (sy + 1.0) * H * 0.5 - 0.5
    inp1 = jnp.concatenate([inp, jnp.ones((N, H, W, 1), inp.dtype)], axis=-1)
    flat = inp1.reshape(N, H * W, C + 1)
    x0 = jnp.floor(ix)
    y0 = jnp.floor(iy)
    wx = (ix - x0)[..., None]
    wy = (iy - y0)[..., None]

    def gather(yy, xx):
        yy = jnp.clip(yy, 0, H - 1).astype(jnp.int32)
        xx = jnp.clip(xx, 0, W - 1).astype(jnp.int32)
        idx = (yy * W + xx).reshape(N, Hf * Wf, 1)
        g = jnp.take_along_axis(flat, jnp.broadcast_to(idx, (N, Hf * Wf, C + 1)), axis=1)
        return g.reshape(N, Hf, Wf, C + 1)

    v00 = gather(y0, x0)
    v01 = gather(y0, x0 + 1)
    v10 = gather(y0 + 1, x0)
    v11 = gather(y0 + 1, x0 + 1)
    out = (v00 * (1 - wx) * (1 - wy) + v01 * wx * (1 - wy)
           + v10 * (1 - wx) * wy + v11 * wx * wy)
    mask = jnp.where(out[..., -1:] > 0.999, 1.0, 0.0)
    return out[..., :-1] * mask


def _nhwc(x):
    return jnp.transpose(x, (0, 2, 3, 1))


def _nchw(x):
    return jnp.transpose(x, (0, 3, 1, 2))


# ---------------------------------------------------------------------------
# Deterministic parameter initialization (synthetic weights; no checkpoint)
# ---------------------------------------------------------------------------
def init_params(seed=0):
    key = jax.random.PRNGKey(seed)
    ctr = [0]

    def nk():
        ctr[0] += 1
        return jax.random.fold_in(key, ctr[0])

    def conv_p(cin, cout, k=3):
        kw_, kb_ = jax.random.split(nk())
        scale = 1.0 / math.sqrt(cin * k * k)
        return (jax.random.normal(kw_, (cout, cin, k, k), jnp.float32) * scale,
                jax.random.normal(kb_, (cout,), jnp.float32) * 0.01)

    def deconv_p(cin, cout, k=4):
        kw_, kb_ = jax.random.split(nk())
        scale = 1.0 / math.sqrt(cin * k * k)
        return (jax.random.normal(kw_, (cin, cout, k, k), jnp.float32) * scale,
                jax.random.normal(kb_, (cout,), jnp.float32) * 0.01)

    P = {}
    chans = [(3, 16), (16, 32), (32, 64), (64, 96), (96, 128), (128, 196)]
    P['extr'] = [[conv_p(ci, co), conv_p(co, co), conv_p(co, co)] for ci, co in chans]

    table = {2: 81 + 32 + 2 + 2, 3: 81 + 64 + 2 + 2, 4: 81 + 96 + 2 + 2,
             5: 81 + 128 + 2 + 2, 6: 81}
    P['dec'] = {}
    for lvl in (2, 3, 4, 5, 6):
        cur = table[lvl]
        d = {}
        if lvl < 6:
            prev = table[lvl + 1]
            d['upflow'] = deconv_p(2, 2)
            d['upfeat'] = deconv_p(prev + 128 + 128 + 96 + 64 + 32, 2)
        d['one'] = conv_p(cur, 128)
        d['two'] = conv_p(cur + 128, 128)
        d['thr'] = conv_p(cur + 256, 96)
        d['fou'] = conv_p(cur + 352, 64)
        d['fiv'] = conv_p(cur + 416, 32)
        d['six'] = conv_p(cur + 448, 2)
        P['dec'][lvl] = d

    P['ref'] = [conv_p(565, 128), conv_p(128, 128), conv_p(128, 128),
                conv_p(128, 96), conv_p(96, 64), conv_p(64, 32), conv_p(32, 2)]
    return P


# ---------------------------------------------------------------------------
# Network forward (mirrors PWCNet_side.forward)
# ---------------------------------------------------------------------------
def extractor_forward(x_nhwc, P):
    feats = []
    x = x_nhwc
    for lvl in range(6):
        (w0, b0), (w1, b1), (w2, b2) = P['extr'][lvl]
        x = conv2d(x, w0, b0, stride=2, padding=1, relu=True)
        x = conv2d(x, w1, b1, stride=1, padding=1, relu=True)
        x = conv2d(x, w2, b2, stride=1, padding=1, relu=True)
        feats.append(x)
    return feats


_DBL_BACKWARD = {2: 5.0, 3: 2.5, 4: 1.25, 5: 0.625}


def decoder_forward(lvl, P, first, second, prev):
    d = P['dec'][lvl]
    if prev is None:
        feat = correlation_nhwc(first, second)
        flow = None
    else:
        flow = conv_transpose2d(prev['flow'], *d['upflow'])
        upfeat = conv_transpose2d(prev['feat'], *d['upfeat'])
        warped = backward_warp_nhwc(second, flow * _DBL_BACKWARD[lvl], factor=1.0)
        vol = correlation_nhwc(first, warped)
        feat = jnp.concatenate([vol, first, flow, upfeat], axis=-1)
    feat = jnp.concatenate([conv2d(feat, *d['one']), feat], axis=-1)
    feat = jnp.concatenate([conv2d(feat, *d['two']), feat], axis=-1)
    feat = jnp.concatenate([conv2d(feat, *d['thr']), feat], axis=-1)
    feat = jnp.concatenate([conv2d(feat, *d['fou']), feat], axis=-1)
    feat = jnp.concatenate([conv2d(feat, *d['fiv']), feat], axis=-1)
    flow = conv2d(feat, *d['six'], relu=False)
    return {'flow': flow, 'feat': feat}


def refiner_forward(feat, P):
    specs = [(1, 1), (2, 2), (4, 4), (8, 8), (16, 16), (1, 1), (1, 1)]
    x = feat
    for i, ((w, b), (pad, dil)) in enumerate(zip(P['ref'], specs)):
        x = conv2d(x, w, b, stride=1, padding=pad, dilation=dil, relu=(i < 6))
    return x


def pwcnet_side_forward(tensorFirst, tensorSecond, P):
    """Inputs NCHW float32; returns (side_frame NCHW, tensorFlow NCHW)."""
    if tensorFirst.shape[2] == AA_TALL:
        a, aa, b, bb = A_TALL, AA_TALL, B_TALL, BB_TALL
    else:
        a, aa, b, bb = B_TALL, B_TALL, A_TALL, AA_TALL

    first_up = interpolate_bilinear_nchw(tensorFirst, (a, b))
    second_up = interpolate_bilinear_nchw(tensorSecond, (a, b))

    f_feats = extractor_forward(_nhwc(first_up), P)
    s_feats = extractor_forward(_nhwc(second_up), P)

    est = decoder_forward(6, P, f_feats[-1], s_feats[-1], None)
    est = decoder_forward(5, P, f_feats[-2], s_feats[-2], est)
    est = decoder_forward(4, P, f_feats[-3], s_feats[-3], est)
    est = decoder_forward(3, P, f_feats[-4], s_feats[-4], est)
    est = decoder_forward(2, P, f_feats[-5], s_feats[-5], est)

    flow = est['flow'] + refiner_forward(est['feat'], P)        # NHWC (N, h, w, 2), bf16
    flow_nchw = _nchw(flow).astype(jnp.float32)
    tensorFlow = 20.0 * interpolate_bilinear_nchw(flow_nchw, (aa, bb))
    tensorFlow = tensorFlow.at[:, 0, :, :].multiply(float(bb) / float(b))
    tensorFlow = tensorFlow.at[:, 1, :, :].multiply(float(aa) / float(a))

    side = backward_warp_nhwc(_nhwc(tensorSecond), _nhwc(tensorFlow), factor=0.25)
    return _nchw(side), tensorFlow


# ---------------------------------------------------------------------------
if __name__ == "__main__":
    params = init_params(seed=0)

    key = jax.random.PRNGKey(0)
    k1, k2 = jax.random.split(key)
    # Small analog of a 720x1280 frame pair: (N=1, C=3, H=60, W=128).
    tensorFirst = jax.random.uniform(k1, (1, 3, 60, 128), jnp.float32)
    tensorSecond = jax.random.uniform(k2, (1, 3, 60, 128), jnp.float32)

    side_frame, tensorFlow = pwcnet_side_forward(tensorFirst, tensorSecond, params)
    jax.block_until_ready((side_frame, tensorFlow))

    assert side_frame.shape == (1, 3, 60, 128)
    assert tensorFlow.shape == (1, 2, 60, 128)
    print("KERNEL_OK")
</pallas_src>

<mosaic_0001>
module attributes {stable_mosaic.version = 11 : i64} {
  func.func @_mm_kernel(%arg0: i32, %arg1: i32, %arg2: i32, %arg3: memref<1x256x128xbf16, #tpu.memory_space<vmem>>, %arg4: memref<128x16xbf16, #tpu.memory_space<vmem>>, %arg5: memref<1x16xf32, #tpu.memory_space<vmem>>, %arg6: memref<1x256x16xbf16, #tpu.memory_space<vmem>>, %arg7: memref<256x16xf32, #tpu.memory_space<vmem>>) attributes {dimension_semantics = [#tpu.dimension_semantics<parallel>, #tpu.dimension_semantics<parallel>, #tpu.dimension_semantics<arbitrary>], iteration_bounds = array<i64: 1, 8, 1>, scalar_prefetch = 0 : i64, scratch_operands = 1 : i64, tpu.core_type = #tpu.core_type<tc>, window_params = [{transform_indices = @transform_0, window_bounds = array<i64: 1, 256, 128>}, {transform_indices = @transform_1, window_bounds = array<i64: 128, 16>}, {pipeline_mode = #tpu.pipeline_mode<synchronous>, transform_indices = @transform_2, window_bounds = array<i64: 1, 16>}, {transform_indices = @transform_3, window_bounds = array<i64: 1, 256, 16>}]} {
    %c0_i32 = arith.constant 0 : i32
    %0 = arith.cmpi eq, %arg2, %c0_i32 : i32
    %1 = arith.extui %0 : i1 to i32
    %c0_i32_0 = arith.constant 0 : i32
    %2 = arith.cmpi ne, %1, %c0_i32_0 : i32
    scf.if %2 {
      %cst_11 = arith.constant 0.000000e+00 : f32
      %13 = vector.broadcast %cst_11 : f32 to vector<256x16xf32>
      %c0_12 = arith.constant 0 : index
      %c0_13 = arith.constant 0 : index
      %14 = vector.load %arg7[%c0_12, %c0_13] : memref<256x16xf32, #tpu.memory_space<vmem>>, vector<256x16xf32>
      tpu.vector_store %arg7[%c0_12, %c0_13], %13 {strides = array<i32>} : memref<256x16xf32, #tpu.memory_space<vmem>>, vector<256x16xf32>,
    } else {
    }
    %c0 = arith.constant 0 : index
    %c0_1 = arith.constant 0 : index
    %3 = vector.load %arg7[%c0, %c0_1] : memref<256x16xf32, #tpu.memory_space<vmem>>, vector<256x16xf32>
    %c0_2 = arith.constant 0 : index
    %c0_3 = arith.constant 0 : index
    %c0_4 = arith.constant 0 : index
    %4 = vector.load %arg3[%c0_2, %c0_3, %c0_4] : memref<1x256x128xbf16, #tpu.memory_space<vmem>>, vector<1x256x128xbf16>
    %5 = vector.shape_cast %4 : vector<1x256x128xbf16> to vector<256x128xbf16>
    %c0_5 = arith.constant 0 : index
    %c0_6 = arith.constant 0 : index
    %6 = vector.load %arg4[%c0_5, %c0_6] : memref<128x16xbf16, #tpu.memory_space<vmem>>, vector<128x16xbf16>
    %cst = arith.constant dense<0.000000e+00> : vector<256x16xf32>
    %7 = tpu.matmul %5, %6, %cst {dimension_numbers = #tpu.dot_dimension_numbers<[1], [0], [0], [1], [0, 0, 1, 1], [], []>} : vector<256x128xbf16>, vector<128x16xbf16>, vector<256x16xf32> -> vector<256x16xf32>
    %8 = arith.addf %3, %7 : vector<256x16xf32>
    %c0_7 = arith.constant 0 : index
    %c0_8 = arith.constant 0 : index
    %9 = vector.load %arg7[%c0_7, %c0_8] : memref<256x16xf32, #tpu.memory_space<vmem>>, vector<256x16xf32>
    tpu.vector_store %arg7[%c0_7, %c0_8], %8 {strides = array<i32>} : memref<256x16xf32, #tpu.memory_space<vmem>>, vector<256x16xf32>,
    %c0_i32_9 = arith.constant 0 : i32
    %10 = arith.cmpi eq, %arg2, %c0_i32_9 : i32
    %11 = arith.extui %10 : i1 to i32
    %c0_i32_10 = arith.constant 0 : i32
    %12 = arith.cmpi ne, %11, %c0_i32_10 : i32
    scf.if %12 {
      %c0_11 = arith.constant 0 : index
      %c0_12 = arith.constant 0 : index
      %13 = vector.load %arg7[%c0_11, %c0_12] : memref<256x16xf32, #tpu.memory_space<vmem>>, vector<256x16xf32>
      %c0_13 = arith.constant 0 : index
      %c0_14 = arith.constant 0 : index
      %14 = vector.load %arg5[%c0_13, %c0_14] : memref<1x16xf32, #tpu.memory_space<vmem>>, vector<1x16xf32>
      %15 = vector.broadcast %14 : vector<1x16xf32> to vector<256x16xf32>
      %16 = arith.addf %13, %15 : vector<256x16xf32>
      %cst_15 = arith.constant 0.000000e+00 : f32
      %17 = vector.broadcast %cst_15 : f32 to vector<256x16xf32>
      %18 = arith.cmpf oge, %16, %17 : vector<256x16xf32>
      %cst_16 = arith.constant 1.000000e-01 : f32
      %19 = vector.broadcast %cst_16 : f32 to vector<256x16xf32>
      %20 = arith.mulf %16, %19 : vector<256x16xf32>
      %21 = arith.select %18, %16, %20 : vector<256x16xi1>, vector<256x16xf32>
      %22 = arith.truncf %21 : vector<256x16xf32> to vector<256x16xbf16>
      %c0_17 = arith.constant 0 : index
      %c0_18 = arith.constant 0 : index
      %c0_19 = arith.constant 0 : index
      %23 = vector.load %arg6[%c0_17, %c0_18, %c0_19] : memref<1x256x16xbf16, #tpu.memory_space<vmem>>, vector<1x256x16xbf16>
      %24 = vector.shape_cast %23 : vector<1x256x16xbf16> to vector<256x16xbf16>
      %25 = vector.shape_cast %22 : vector<256x16xbf16> to vector<1x256x16xbf16>
      tpu.vector_store %arg6[%c0_17, %c0_18, %c0_19], %25 {strides = array<i32>} : memref<1x256x16xbf16, #tpu.memory_space<vmem>>, vector<1x256x16xbf16>,
    } else {
    }
    return
  }
  func.func @transform_0(%arg0: i32, %arg1: i32, %arg2: i32) -> (i32, i32, i32) {
    %c0_i32 = arith.constant 0 : i32
    return %arg0, %arg1, %arg2 : i32, i32, i32
  }
  func.func @transform_1(%arg0: i32, %arg1: i32, %arg2: i32) -> (i32, i32) {
    %c0_i32 = arith.constant 0 : i32
    %c0_i32_0 = arith.constant 0 : i32
    return %arg2, %c0_i32 : i32, i32
  }
  func.func @transform_2(%arg0: i32, %arg1: i32, %arg2: i32) -> (i32, i32) {
    %c0_i32 = arith.constant 0 : i32
    %c0_i32_0 = arith.constant 0 : i32
    %c0_i32_1 = arith.constant 0 : i32
    return %c0_i32, %c0_i32_0 : i32, i32
  }
  func.func @transform_3(%arg0: i32, %arg1: i32, %arg2: i32) -> (i32, i32, i32) {
    %c0_i32 = arith.constant 0 : i32
    %c0_i32_0 = arith.constant 0 : i32
    return %arg0, %arg1, %c0_i32 : i32, i32, i32
  }
}

</mosaic_0001>

<llo_original>
// kernel: tpu_custom_call.1
$region0: #{tpu_custom_call.1}
  #allocation0 [shape = 'u32[]', space=smem, size = 0x4, offset = 0x4, fixed_abs, tag = 'smem constant byte address 0x4 - core index']
  #allocation1 [shape = 'u32[144,128]{1,0:T(1,128)}', space=vmem, size = 0x12000, scoped, tag = 'internal scratch']
  #allocation2 [shape = 'f32[256,16]{1,0:T(8,128)}', space=vmem, size = 0x20000, scoped, tag = 'scratch operand']
  %s0 = inlined_call_operand.hbm [shape: bf16[1,2048,128], index: 0, kind: input, shape index: {}]
  %s1 = inlined_call_operand.vmem [shape: bf16[128,16], index: 1, kind: input, shape index: {}]
  %s2 = inlined_call_operand.vmem [shape: f32[1,16], index: 2, kind: input, shape index: {}]
  %s3 = inlined_call_operand.vmem [shape: bf16[1,2048,16], index: 3, kind: output, shape index: {}]
  %s4 = sld [smem:[#allocation0]]
  $region57: #{tpu_custom_call.1} parent=0
    _
  %s6 = ssub.s32 1, %s4
  %s7 = scalar_select 0, %s6, %s4
  $region1: #{tpu_custom_call.1} parent=0
    #allocation3 [shape = 'u8[131072]{0}', space=vmem, size = 0x20000, scoped, tag = 'input window, operand 0']
    #allocation4 [shape = 's32[2]{0}', space=sflag, size = 0x8, scoped, tag = 'scoped memory for tpu_custom_call.1']
    %8 = vsyncpa [#allocation4], 0
    %s9 = scalar_lea.sflag [#allocation4], 1
    %10 = vsyncpa %s9, 0
    loop: start=0, step=1, limit=10
    $region2: #{tpu_custom_call.1} parent=1 // loop_pre_header
      _
    $region3: #{tpu_custom_call.1} parent=1 // loop_header
      %s12 = sphi 0, %s16
      %p13 = scmp.ge.s32.totalorder %s12, 10
      %s19 = sphi 0, %s38
      %s20 = sphi 0, %s34
      %s21 = sphi 0, %s30
      %s22 = sphi 0, %s19
      %s23 = sphi 0, %s20
      %s24 = sphi 0, %s21
      %s25 = sphi 0, %s22
      %s26 = sphi 0, %s23
      %s27 = sphi 0, %s24
      %s45 = sphi 0, %s47
      %s48 = sphi 0, %s45
      %s49 = sphi 0, %s48
      %s65 = sphi 0, %s49
      %s71 = sphi 0, %s73
      %s74 = sphi 0, %s71
      %s75 = sphi 0, %s74
      %s91 = sphi 0, %s75
      %s95 = sphi 0, %s95
      %s97 = sphi 0, %s95
      %s98 = sphi 0, %s97
      %s112 = sphi 0, %s98
      %s120 = sphi 0, %s122
      %s123 = sphi 0, %s120
      %s124 = sphi 0, %s123
      %s140 = sphi 0, %s124
    $region4: #{tpu_custom_call.1} parent=1 // loop_header_branch
      %15 = sbr.rel (%p13) target = $region8
    $region5: #{tpu_custom_call.1} parent=1 // loop_body
      %s17 = ssub.s32 %s12, 1
      %s18 = ssub.s32 %s12, 2
      %s28 = sadd.s32 1, %s21
      %p29 = scmp.ge.s32.totalorder %s28, 1
      %s30 = scalar_select %p29, 0, %s28
      %s31 = sadd.s32 1, %s20
      %s32 = scalar_select %p29, %s31, %s20
      %p33 = scmp.ge.s32.totalorder %s32, 8
      %s34 = scalar_select %p33, 0, %s32
      %s35 = sadd.s32 1, %s19
      %s36 = scalar_select %p33, %s35, %s19
      %p37 = scmp.ge.s32.totalorder %s36, 1
      %s38 = scalar_select %p37, 0, %s36
      %s39 = ssub.s32 %s19, %s38
      %s40 = ssub.s32 %s20, %s34
      %s41 = sor.u32 %s39, %s40
      %s42 = ssub.s32 %s21, %s30
      %s43 = sor.u32 %s41, %s42
      %p44 = scmp.eq.s32.totalorder %s43, 0
      %s46 = sadd.s32 %s45, 1
      %s47 = scalar_select %p44, %s45, %s46
      %p50 = pneg %p44
      %p51 = scmp.eq.s32.totalorder %s12, 7
      %p52 = por %p50, %p51
      %p53 = scmp.ne.s32.totalorder %s45, %s48
      %p54 = scmp.eq.s32.totalorder %s12, 0
      %p55 = por %p53, %p54
      %p56 = scmp.ne.s32.totalorder %s45, %s48
      %p57 = scmp.eq.s32.totalorder %s17, 7
      %p58 = por %p56, %p57
      %p59 = scmp.ne.s32.totalorder %s48, %s49
      %p60 = scmp.eq.s32.totalorder %s17, 0
      %p61 = por %p59, %p60
      %p62 = scmp.ne.s32.totalorder %s48, %s49
      %p63 = scmp.eq.s32.totalorder %s18, 7
      %p64 = por %p62, %p63
      %p66 = scmp.ne.s32.totalorder %s49, %s65
      %p67 = scmp.eq.s32.totalorder %s18, 0
      %p68 = por %p66, %p67
      %s69 = ssub.s32 %s21, %s30
      %p70 = scmp.eq.s32.totalorder %s69, 0
      %s72 = sadd.s32 %s71, 1
      %s73 = scalar_select %p70, %s71, %s72
      %p76 = pneg %p70
      %p77 = scmp.eq.s32.totalorder %s12, 7
      %p78 = por %p76, %p77
      %p79 = scmp.ne.s32.totalorder %s71, %s74
      %p80 = scmp.eq.s32.totalorder %s12, 0
      %p81 = por %p79, %p80
      %p82 = scmp.ne.s32.totalorder %s71, %s74
      %p83 = scmp.eq.s32.totalorder %s17, 7
      %p84 = por %p82, %p83
      %p85 = scmp.ne.s32.totalorder %s74, %s75
      %p86 = scmp.eq.s32.totalorder %s17, 0
      %p87 = por %p85, %p86
      %p88 = scmp.ne.s32.totalorder %s74, %s75
      %p89 = scmp.eq.s32.totalorder %s18, 7
      %p90 = por %p88, %p89
      %p92 = scmp.ne.s32.totalorder %s75, %s91
      %p93 = scmp.eq.s32.totalorder %s18, 0
      %p94 = por %p92, %p93
      %s96 = sadd.s32 %s95, 1
      %p99 = scmp.eq.s32.totalorder %s12, 7
      %p100 = scmp.ne.s32.totalorder %s95, %s97
      %p101 = scmp.eq.s32.totalorder %s12, 0
      %p102 = por %p100, %p101
      %p103 = scmp.ne.s32.totalorder %s95, %s97
      %p104 = scmp.eq.s32.totalorder %s17, 7
      %p105 = por %p103, %p104
      %p106 = scmp.ne.s32.totalorder %s97, %s98
      %p107 = scmp.eq.s32.totalorder %s17, 0
      %p108 = por %p106, %p107
      %p109 = scmp.ne.s32.totalorder %s97, %s98
      %p110 = scmp.eq.s32.totalorder %s18, 7
      %p111 = por %p109, %p110
      %p113 = scmp.ne.s32.totalorder %s98, %s112
      %p114 = scmp.eq.s32.totalorder %s18, 0
      %p115 = por %p113, %p114
      %s116 = ssub.s32 %s19, %s38
      %s117 = ssub.s32 %s20, %s34
      %s118 = sor.u32 %s116, %s117
      %p119 = scmp.eq.s32.totalorder %s118, 0
      %s121 = sadd.s32 %s120, 1
      %s122 = scalar_select %p119, %s120, %s121
      %p125 = pneg %p119
      %p126 = scmp.eq.s32.totalorder %s12, 7
      %p127 = por %p125, %p126
      %p128 = scmp.ne.s32.totalorder %s120, %s123
      %p129 = scmp.eq.s32.totalorder %s12, 0
      %p130 = por %p128, %p129
      %p131 = scmp.ne.s32.totalorder %s120, %s123
      %p132 = scmp.eq.s32.totalorder %s17, 7
      %p133 = por %p131, %p132
      %p134 = scmp.ne.s32.totalorder %s123, %s124
      %p135 = scmp.eq.s32.totalorder %s17, 0
      %p136 = por %p134, %p135
      %p137 = scmp.ne.s32.totalorder %s123, %s124
      %p138 = scmp.eq.s32.totalorder %s18, 7
      %p139 = por %p137, %p138
      %p141 = scmp.ne.s32.totalorder %s124, %s140
      %p142 = scmp.eq.s32.totalorder %s18, 0
      %p143 = por %p141, %p142
      %p144 = scmp.le.s32.totalorder 1, %s12
      %p145 = scmp.lt.s32.totalorder %s12, 9
      %p146 = pnand %p144, %p145
      %p147 = pneg %p146
      // Predicated region
      $region9: #{tpu_custom_call.1} parent=5 // pred_check
        _
      $region10: #{tpu_custom_call.1} parent=5 // pred_check_branch
        %149 = sbr.rel (%p146) target = $region12
      $region11: #{tpu_custom_call.1} parent=5 // pred_region
        %s150 = ssub.s32 %s12, 1
        // Predicated region
        $region13: #{tpu_custom_call.1} parent=11 // pred_check
          %p151 = pneg %p87
        $region14: #{tpu_custom_call.1} parent=11 // pred_check_branch
          %153 = sbr.rel (%p151) target = $region16
        $region15: #{tpu_custom_call.1} parent=11 // pred_region
          %s154 = smul.u32 16, %s24
          %p155 = scmp.lt.s32.totalorder %s154, 15
          %s156 = scalar_select %p155, %s154, 15
          %s157 = smul.addr %s156, 4
          %s158 = scalar_lea.vmem %s1, %s157
          %s159 = smul.u32 16, %s24
        $region16: #{tpu_custom_call.1} parent=11 // pred_fallthru
          _
        // Predicated region
        $region17: #{tpu_custom_call.1} parent=11 // pred_check
          %p160 = pneg %p108
        $region18: #{tpu_custom_call.1} parent=11 // pred_check_branch
          %162 = sbr.rel (%p160) target = $region20
        $region19: #{tpu_custom_call.1} parent=11 // pred_region
          _
        $region20: #{tpu_custom_call.1} parent=11 // pred_fallthru
          _
      $region12: #{tpu_custom_call.1} parent=5 // pred_fallthru
        _
      %p163 = scmp.lt.s32.totalorder %s12, 8
      // Predicated region
      $region21: #{tpu_custom_call.1} parent=5 // pred_check
        %p164 = pneg %p163
      $region22: #{tpu_custom_call.1} parent=5 // pred_check_branch
        %166 = sbr.rel (%p164) target = $region24
      $region23: #{tpu_custom_call.1} parent=5 // pred_region
        // Predicated region
        $region25: #{tpu_custom_call.1} parent=23 // pred_check
          %p167 = pneg %p55
        $region26: #{tpu_custom_call.1} parent=23 // pred_check_branch
          %169 = sbr.rel (%p167) target = $region28
        $region27: #{tpu_custom_call.1} parent=23 // pred_region
          %s170 = sand.u32 %s45, 1
          %s171 = scalar_lea.sflag [#allocation4], %s170
          %s172 = sand.u32 %s45, 1
          %s173 = smul.addr %s172, 128
          %s174 = scalar_lea.vmem [#allocation3], %s173
          %s175 = smul.u32 32, %s20
          %s177 = ssub.s32 2048, 2048
          %178 = vsyncadd %s171, %s177
          %s179 = sadd.s32 %s21, %s175
          %s180 = smul.addr %s19, 256
          %s181 = sadd.s32 %s179, %s180
          %s182 = smul.addr %s181, 64
          %s183 = scalar_lea.hbm %s0, %s182
          %s184 = sshll.u32 %s174, 4
          %s185 = int_to_ptr.vmem [resolvable:$true] %s184
          %190 = dma.hbm_to_vmem [thread:$0]  %s183, 2048, %s185, %s171, 64, 64, 4
        $region28: #{tpu_custom_call.1} parent=23 // pred_fallthru
          _
      $region24: #{tpu_custom_call.1} parent=5 // pred_fallthru
        _
      %p191 = scmp.le.s32.totalorder 1, %s12
      %p192 = scmp.lt.s32.totalorder %s12, 9
      %p193 = pnand %p191, %p192
      %p194 = pneg %p193
      // Predicated region
      $region29: #{tpu_custom_call.1} parent=5 // pred_check
        _
      $region30: #{tpu_custom_call.1} parent=5 // pred_check_branch
        %196 = sbr.rel (%p193) target = $region32
      $region31: #{tpu_custom_call.1} parent=5 // pred_region
        %s197 = ssub.s32 %s12, 1
        %s198 = sand.u32 %s48, 1
        %s199 = scalar_lea.sflag [#allocation4], %s198
        %s200 = sand.u32 %s48, 1
        %s201 = smul.addr %s200, 128
        %s202 = scalar_lea.vmem [#allocation3], %s201
        // Predicated region
        $region33: #{tpu_custom_call.1} parent=31 // pred_check
          %p203 = pneg %p61
        $region34: #{tpu_custom_call.1} parent=31 // pred_check_branch
          %205 = sbr.rel (%p203) target = $region36
        $region35: #{tpu_custom_call.1} parent=31 // pred_region
          %206 = dma.done %s199, 2048
        $region36: #{tpu_custom_call.1} parent=31 // pred_fallthru
          _
        %s207 = sand.u32 %s48, 1
        %s208 = scalar_lea.sflag [#allocation4], %s207
        %s209 = sand.u32 %s48, 1
        %s210 = smul.addr %s209, 128
        %s211 = scalar_lea.vmem [#allocation3], %s210
        %p212 = pneg %p61
        %p213 = pneg %p58
        %s214 = smul.u32 16, %s24
        %p215 = scmp.lt.s32.totalorder %s214, 15
        %s216 = scalar_select %p215, %s214, 15
        %s217 = smul.addr %s216, 4
        %s218 = scalar_lea.vmem %s1, %s217
        %p219 = pneg %p87
        %p220 = pneg %p84
        %p221 = pneg %p108
        %p222 = pneg %p105
        %p223 = pneg %p136
        %p224 = pneg %p133
        %s225 = smul.u32 32, %s23
        %p226 = scmp.lt.s32.totalorder %s22, 0
        %s227 = scalar_select %p226, %s22, 0
        %p228 = scmp.lt.s32.totalorder %s225, 255
        %s229 = scalar_select %p228, %s225, 255
        %s230 = smul.addr %s227, 256
        %s231 = sadd.s32 %s229, %s230
        %s232 = smul.addr %s231, 4
        %s233 = scalar_lea.vmem %s3, %s232
        %s234 = smul.u32 32, %s23
        %s235 = smul.u32 16, %s24
        %p236 = scmp.lt.s32.totalorder %s235, 15
        %s237 = scalar_select %p236, %s235, 15
        %s238 = smul.addr %s237, 4
        %s239 = scalar_lea.vmem %s1, %s238
        %s240 = smul.u32 16, %s24
        %s241 = smul.u32 32, %s23
        %p242 = scmp.lt.s32.totalorder %s22, 0
        %s243 = scalar_select %p242, %s22, 0
        %p244 = scmp.lt.s32.totalorder %s241, 255
        %s245 = scalar_select %p244, %s241, 255
        %s246 = smul.addr %s243, 256
        %s247 = sadd.s32 %s245, %s246
        %s248 = smul.addr %s247, 4
        %s249 = scalar_lea.vmem %s3, %s248
        %s250 = smul.u32 32, %s23
        %p252 = scmp.eq.s32.totalorder %s24, 0
        // Predicated region
        $region37: #{tpu_custom_call.1} parent=31 // pred_check
          %p253 = pneg %p252
        $region38: #{tpu_custom_call.1} parent=31 // pred_check_branch
          %255 = sbr.rel (%p253) target = $region40
        $region39: #{tpu_custom_call.1} parent=31 // pred_region
          %vm256 = vcmask 130048
          %257 = vst.msk [vmem:[#allocation2] sm:$0xff] %vm256, 0.0
          %258 = vst.msk [vmem:[#allocation2 + $0x8] sm:$0xff] %vm256, 0.0
          %259 = vst.msk [vmem:[#allocation2 + $0x10] sm:$0xff] %vm256, 0.0
          %260 = vst.msk [vmem:[#allocation2 + $0x18] sm:$0xff] %vm256, 0.0
          %261 = vst.msk [vmem:[#allocation2 + $0x20] sm:$0xff] %vm256, 0.0
          %262 = vst.msk [vmem:[#allocation2 + $0x28] sm:$0xff] %vm256, 0.0
          %263 = vst.msk [vmem:[#allocation2 + $0x30] sm:$0xff] %vm256, 0.0
          %264 = vst.msk [vmem:[#allocation2 + $0x38] sm:$0xff] %vm256, 0.0
          %265 = vst.msk [vmem:[#allocation2 + $0x40] sm:$0xff] %vm256, 0.0
          %266 = vst.msk [vmem:[#allocation2 + $0x48] sm:$0xff] %vm256, 0.0
          %267 = vst.msk [vmem:[#allocation2 + $0x50] sm:$0xff] %vm256, 0.0
          %268 = vst.msk [vmem:[#allocation2 + $0x58] sm:$0xff] %vm256, 0.0
          %269 = vst.msk [vmem:[#allocation2 + $0x60] sm:$0xff] %vm256, 0.0
          %270 = vst.msk [vmem:[#allocation2 + $0x68] sm:$0xff] %vm256, 0.0
          %271 = vst.msk [vmem:[#allocation2 + $0x70] sm:$0xff] %vm256, 0.0
          %272 = vst.msk [vmem:[#allocation2 + $0x78] sm:$0xff] %vm256, 0.0
          %273 = vst.msk [vmem:[#allocation2 + $0x80] sm:$0xff] %vm256, 0.0
          %274 = vst.msk [vmem:[#allocation2 + $0x88] sm:$0xff] %vm256, 0.0
          %275 = vst.msk [vmem:[#allocation2 + $0x90] sm:$0xff] %vm256, 0.0
          %276 = vst.msk [vmem:[#allocation2 + $0x98] sm:$0xff] %vm256, 0.0
          %277 = vst.msk [vmem:[#allocation2 + $0xa0] sm:$0xff] %vm256, 0.0
          %278 = vst.msk [vmem:[#allocation2 + $0xa8] sm:$0xff] %vm256, 0.0
          %279 = vst.msk [vmem:[#allocation2 + $0xb0] sm:$0xff] %vm256, 0.0
          %280 = vst.msk [vmem:[#allocation2 + $0xb8] sm:$0xff] %vm256, 0.0
          %281 = vst.msk [vmem:[#allocation2 + $0xc0] sm:$0xff] %vm256, 0.0
          %282 = vst.msk [vmem:[#allocation2 + $0xc8] sm:$0xff] %vm256, 0.0
          %283 = vst.msk [vmem:[#allocation2 + $0xd0] sm:$0xff] %vm256, 0.0
          %284 = vst.msk [vmem:[#allocation2 + $0xd8] sm:$0xff] %vm256, 0.0
          %285 = vst.msk [vmem:[#allocation2 + $0xe0] sm:$0xff] %vm256, 0.0
          %286 = vst.msk [vmem:[#allocation2 + $0xe8] sm:$0xff] %vm256, 0.0
          %287 = vst.msk [vmem:[#allocation2 + $0xf0] sm:$0xff] %vm256, 0.0
          %288 = vst.msk [vmem:[#allocation2 + $0xf8] sm:$0xff] %vm256, 0.0
        $region40: #{tpu_custom_call.1} parent=31 // pred_fallthru
          _
        %v289 = vld [vmem:[#allocation2] sm:$0xff]
        %v290 = vld [vmem:[#allocation2 + $0x8] sm:$0xff]
        %v291 = vld [vmem:[#allocation2 + $0x10] sm:$0xff]
        %v292 = vld [vmem:[#allocation2 + $0x18] sm:$0xff]
        %v293 = vld [vmem:[#allocation2 + $0x20] sm:$0xff]
        %v294 = vld [vmem:[#allocation2 + $0x28] sm:$0xff]
        %v295 = vld [vmem:[#allocation2 + $0x30] sm:$0xff]
        %v296 = vld [vmem:[#allocation2 + $0x38] sm:$0xff]
        %v297 = vld [vmem:[#allocation2 + $0x40] sm:$0xff]
        %v298 = vld [vmem:[#allocation2 + $0x48] sm:$0xff]
        %v299 = vld [vmem:[#allocation2 + $0x50] sm:$0xff]
        %v300 = vld [vmem:[#allocation2 + $0x58] sm:$0xff]
        %v301 = vld [vmem:[#allocation2 + $0x60] sm:$0xff]
        %v302 = vld [vmem:[#allocation2 + $0x68] sm:$0xff]
        %v303 = vld [vmem:[#allocation2 + $0x70] sm:$0xff]
        %v304 = vld [vmem:[#allocation2 + $0x78] sm:$0xff]
        %v305 = vld [vmem:[#allocation2 + $0x80] sm:$0xff]
        %v306 = vld [vmem:[#allocation2 + $0x88] sm:$0xff]
        %v307 = vld [vmem:[#allocation2 + $0x90] sm:$0xff]
        %v308 = vld [vmem:[#allocation2 + $0x98] sm:$0xff]
        %v309 = vld [vmem:[#allocation2 + $0xa0] sm:$0xff]
        %v310 = vld [vmem:[#allocation2 + $0xa8] sm:$0xff]
        %v311 = vld [vmem:[#allocation2 + $0xb0] sm:$0xff]
        %v312 = vld [vmem:[#allocation2 + $0xb8] sm:$0xff]
        %v313 = vld [vmem:[#allocation2 + $0xc0] sm:$0xff]
        %v314 = vld [vmem:[#allocation2 + $0xc8] sm:$0xff]
        %v315 = vld [vmem:[#allocation2 + $0xd0] sm:$0xff]
        %v316 = vld [vmem:[#allocation2 + $0xd8] sm:$0xff]
        %v317 = vld [vmem:[#allocation2 + $0xe0] sm:$0xff]
        %v318 = vld [vmem:[#allocation2 + $0xe8] sm:$0xff]
        %v319 = vld [vmem:[#allocation2 + $0xf0] sm:$0xff]
        %v320 = vld [vmem:[#allocation2 + $0xf8] sm:$0xff]
        %v321 = vld [vmem:[%s202] sm:$0xf]
        %v322 = vld [vmem:[%s202 + $0x4] sm:$0xf]
        %v323 = vld [vmem:[%s202 + $0x8] sm:$0xf]
        %v324 = vld [vmem:[%s202 + $0xc] sm:$0xf]
        %v325 = vld [vmem:[%s202 + $0x10] sm:$0xf]
        %v326 = vld [vmem:[%s202 + $0x14] sm:$0xf]
        %v327 = vld [vmem:[%s202 + $0x18] sm:$0xf]
        %v328 = vld [vmem:[%s202 + $0x1c] sm:$0xf]
        %v329 = vld [vmem:[%s202 + $0x20] sm:$0xf]
        %v330 = vld [vmem:[%s202 + $0x24] sm:$0xf]
        %v331 = vld [vmem:[%s202 + $0x28] sm:$0xf]
        %v332 = vld [vmem:[%s202 + $0x2c] sm:$0xf]
        %v333 = vld [vmem:[%s202 + $0x30] sm:$0xf]
        %v334 = vld [vmem:[%s202 + $0x34] sm:$0xf]
        %v335 = vld [vmem:[%s202 + $0x38] sm:$0xf]
        %v336 = vld [vmem:[%s202 + $0x3c] sm:$0xf]
        %v337 = vld [vmem:[%s202 + $0x40] sm:$0xf]
        %v338 = vld [vmem:[%s202 + $0x44] sm:$0xf]
        %v339 = vld [vmem:[%s202 + $0x48] sm:$0xf]
        %v340 = vld [vmem:[%s202 + $0x4c] sm:$0xf]
        %v341 = vld [vmem:[%s202 + $0x50] sm:$0xf]
        %v342 = vld [vmem:[%s202 + $0x54] sm:$0xf]
        %v343 = vld [vmem:[%s202 + $0x58] sm:$0xf]
        %v344 = vld [vmem:[%s202 + $0x5c] sm:$0xf]
        %v345 = vld [vmem:[%s202 + $0x60] sm:$0xf]
        %v346 = vld [vmem:[%s202 + $0x64] sm:$0xf]
        %v347 = vld [vmem:[%s202 + $0x68] sm:$0xf]
        %v348 = vld [vmem:[%s202 + $0x6c] sm:$0xf]
        %v349 = vld [vmem:[%s202 + $0x70] sm:$0xf]
        %v350 = vld [vmem:[%s202 + $0x74] sm:$0xf]
        %v351 = vld [vmem:[%s202 + $0x78] sm:$0xf]
        %v352 = vld [vmem:[%s202 + $0x7c] sm:$0xf]
        %v353 = vld [vmem:[%s239] sm:$0xf]
        %v354 = vld [vmem:[%s239 + $0x4] sm:$0xf]
        %v355 = vld [vmem:[%s239 + $0x8] sm:$0xf]
        %v356 = vld [vmem:[%s239 + $0xc] sm:$0xf]
        %v357 = vld [vmem:[%s239 + $0x10] sm:$0xf]
        %v358 = vld [vmem:[%s239 + $0x14] sm:$0xf]
        %v359 = vld [vmem:[%s239 + $0x18] sm:$0xf]
        %v360 = vld [vmem:[%s239 + $0x1c] sm:$0xf]
        %v361 = vld [vmem:[%s239 + $0x20] sm:$0xf]
        %v362 = vld [vmem:[%s239 + $0x24] sm:$0xf]
        %v363 = vld [vmem:[%s239 + $0x28] sm:$0xf]
        %v364 = vld [vmem:[%s239 + $0x2c] sm:$0xf]
        %v365 = vld [vmem:[%s239 + $0x30] sm:$0xf]
        %v366 = vld [vmem:[%s239 + $0x34] sm:$0xf]
        %v367 = vld [vmem:[%s239 + $0x38] sm:$0xf]
        %v368 = vld [vmem:[%s239 + $0x3c] sm:$0xf]
        %v401 = vunpack.c.l.b16 %v321
        %v402 = vunpack.c.l.b16 %v322
        %v403 = vunpack.c.l.b16 %v323
        %v404 = vunpack.c.l.b16 %v324
        %v405 = vunpack.c.l.b16 %v325
        %v406 = vunpack.c.l.b16 %v326
        %v407 = vunpack.c.l.b16 %v327
        %v408 = vunpack.c.l.b16 %v328
        %v409 = vunpack.c.l.b16 %v329
        %v410 = vunpack.c.l.b16 %v330
        %v411 = vunpack.c.l.b16 %v331
        %v412 = vunpack.c.l.b16 %v332
        %v413 = vunpack.c.l.b16 %v333
        %v414 = vunpack.c.l.b16 %v334
        %v415 = vunpack.c.l.b16 %v335
        %v416 = vunpack.c.l.b16 %v336
        %v417 = vunpack.c.l.b16 %v337
        %v418 = vunpack.c.l.b16 %v338
        %v419 = vunpack.c.l.b16 %v339
        %v420 = vunpack.c.l.b16 %v340
        %v421 = vunpack.c.l.b16 %v341
        %v422 = vunpack.c.l.b16 %v342
        %v423 = vunpack.c.l.b16 %v343
        %v424 = vunpack.c.l.b16 %v344
        %v425 = vunpack.c.l.b16 %v345
        %v426 = vunpack.c.l.b16 %v346
        %v427 = vunpack.c.l.b16 %v347
        %v428 = vunpack.c.l.b16 %v348
        %v429 = vunpack.c.l.b16 %v349
        %v430 = vunpack.c.l.b16 %v350
        %v431 = vunpack.c.l.b16 %v351
        %v432 = vunpack.c.l.b16 %v352
        %v433 = vpack.c.b16 %v402, %v401
        %v434 = vpack.c.b16 %v404, %v403
        %v435 = vpack.c.b16 %v406, %v405
        %v436 = vpack.c.b16 %v408, %v407
        %v437 = vpack.c.b16 %v410, %v409
        %v438 = vpack.c.b16 %v412, %v411
        %v439 = vpack.c.b16 %v414, %v413
        %v440 = vpack.c.b16 %v416, %v415
        %v441 = vpack.c.b16 %v418, %v417
        %v442 = vpack.c.b16 %v420, %v419
        %v443 = vpack.c.b16 %v422, %v421
        %v444 = vpack.c.b16 %v424, %v423
        %v445 = vpack.c.b16 %v426, %v425
        %v446 = vpack.c.b16 %v428, %v427
        %v447 = vpack.c.b16 %v430, %v429
        %v448 = vpack.c.b16 %v432, %v431
        %v481 = vunpack.c.l.b16 %v353
        %v482 = vunpack.c.l.b16 %v354
        %v483 = vunpack.c.l.b16 %v355
        %v484 = vunpack.c.l.b16 %v356
        %v485 = vunpack.c.l.b16 %v357
        %v486 = vunpack.c.l.b16 %v358
        %v487 = vunpack.c.l.b16 %v359
        %v488 = vunpack.c.l.b16 %v360
        %v489 = vunpack.c.l.b16 %v361
        %v490 = vunpack.c.l.b16 %v362
        %v491 = vunpack.c.l.b16 %v363
        %v492 = vunpack.c.l.b16 %v364
        %v493 = vunpack.c.l.b16 %v365
        %v494 = vunpack.c.l.b16 %v366
        %v495 = vunpack.c.l.b16 %v367
        %v496 = vunpack.c.l.b16 %v368
        %v497 = vpack.c.b16 %v482, %v481
        %v498 = vpack.c.b16 %v484, %v483
        %v499 = vpack.c.b16 %v486, %v485
        %v500 = vpack.c.b16 %v488, %v487
        %v501 = vpack.c.b16 %v490, %v489
        %v502 = vpack.c.b16 %v492, %v491
        %v503 = vpack.c.b16 %v494, %v493
        %v504 = vpack.c.b16 %v496, %v495
        %513 = vmatprep.subr.bf16.mxu0 0
        %514 = vmatpush1.bf16.msra.mxu0 %v504
        %515 = vmatprep.subr.bf16.mxu0 0
        %516 = vmatpush1.bf16.msra.mxu0 %v503
        %517 = vmatprep.subr.bf16.mxu0 0
        %518 = vmatpush1.bf16.msra.mxu0 %v502
        %519 = vmatprep.subr.bf16.mxu0 0
        %520 = vmatpush1.bf16.msra.mxu0 %v501
        %521 = vmatprep.subr.bf16.mxu0 0
        %522 = vmatpush1.bf16.msra.mxu0 %v500
        %523 = vmatprep.subr.bf16.mxu0 0
        %524 = vmatpush1.bf16.msra.mxu0 %v499
        %525 = vmatprep.subr.bf16.mxu0 0
        %526 = vmatpush1.bf16.msra.mxu0 %v498
        %527 = vmatprep.subr.bf16.mxu0 0
        %528 = vmatpush1.bf16.msra.mxu0 %v497
        %529 = vmatprep.subr.bf16.mxu0 0
        %530 = vmatpush2.bf16.msra.mxu0 0
        %531 = vmatprep.subr.bf16.mxu0 0
        %532 = vmatpush2.bf16.msra.mxu0 0
        %533 = vmatprep.subr.bf16.mxu0 0
        %534 = vmatpush2.bf16.msra.mxu0 0
        %535 = vmatprep.subr.bf16.mxu0 0
        %536 = vmatpush2.bf16.msra.mxu0 0
        %537 = vmatprep.subr.bf16.mxu0 0
        %538 = vmatpush2.bf16.msra.mxu0 0
        %539 = vmatprep.subr.bf16.mxu0 0
        %540 = vmatpush2.bf16.msra.mxu0 0
        %541 = vmatprep.subr.bf16.mxu0 0
        %542 = vmatpush2.bf16.msra.mxu0 0
        %543 = vmatprep.subr.bf16.mxu0 0
        %544 = vmatpush2.bf16.msra.mxu0 0
        %545 = vmatprep.mubr.bf16.mxu0 0
        %546 = vmatmul.mubr.bf16.gmra.mxu0 %v433
        %v547 = vpop.f32.mrf.mxu0
        %v548 = vadd.f32 0.0, %v547
        %v549 = vpop.f32.mrf.mxu0
        %v550 = vpop.f32.mrf.mxu0
        %v551 = vadd.f32 0.0, %v550
        %v552 = vpop.f32.mrf.mxu0
        %553 = vmatprep.mubr.bf16.mxu0 0
        %554 = vmatmul.mubr.bf16.gmra.mxu0 %v434
        %v555 = vpop.f32.mrf.mxu0
        %v556 = vadd.f32 0.0, %v555
        %v557 = vpop.f32.mrf.mxu0
        %v558 = vpop.f32.mrf.mxu0
        %v559 = vadd.f32 0.0, %v558
        %v560 = vpop.f32.mrf.mxu0
        %561 = vmatprep.mubr.bf16.mxu0 0
        %562 = vmatmul.mubr.bf16.gmra.mxu0 %v435
        %v563 = vpop.f32.mrf.mxu0
        %v564 = vadd.f32 0.0, %v563
        %v565 = vpop.f32.mrf.mxu0
        %v566 = vpop.f32.mrf.mxu0
        %v567 = vadd.f32 0.0, %v566
        %v568 = vpop.f32.mrf.mxu0
        %569 = vmatprep.mubr.bf16.mxu0 0
        %570 = vmatmul.mubr.bf16.gmra.mxu0 %v436
        %v571 = vpop.f32.mrf.mxu0
        %v572 = vadd.f32 0.0, %v571
        %v573 = vpop.f32.mrf.mxu0
        %v574 = vpop.f32.mrf.mxu0
        %v575 = vadd.f32 0.0, %v574
        %v576 = vpop.f32.mrf.mxu0
        %577 = vmatprep.mubr.bf16.mxu0 0
        %578 = vmatmul.mubr.bf16.gmra.mxu0 %v437
        %v579 = vpop.f32.mrf.mxu0
        %v580 = vadd.f32 0.0, %v579
        %v581 = vpop.f32.mrf.mxu0
        %v582 = vpop.f32.mrf.mxu0
        %v583 = vadd.f32 0.0, %v582
        %v584 = vpop.f32.mrf.mxu0
        %585 = vmatprep.mubr.bf16.mxu0 0
        %586 = vmatmul.mubr.bf16.gmra.mxu0 %v438
        %v587 = vpop.f32.mrf.mxu0
        %v588 = vadd.f32 0.0, %v587
        %v589 = vpop.f32.mrf.mxu0
        %v590 = vpop.f32.mrf.mxu0
        %v591 = vadd.f32 0.0, %v590
        %v592 = vpop.f32.mrf.mxu0
        %593 = vmatprep.mubr.bf16.mxu0 0
        %594 = vmatmul.mubr.bf16.gmra.mxu0 %v439
        %v595 = vpop.f32.mrf.mxu0
        %v596 = vadd.f32 0.0, %v595
        %v597 = vpop.f32.mrf.mxu0
        %v598 = vpop.f32.mrf.mxu0
        %v599 = vadd.f32 0.0, %v598
        %v600 = vpop.f32.mrf.mxu0
        %601 = vmatprep.mubr.bf16.mxu0 0
        %602 = vmatmul.mubr.bf16.gmra.mxu0 %v440
        %v603 = vpop.f32.mrf.mxu0
        %v604 = vadd.f32 0.0, %v603
        %v605 = vpop.f32.mrf.mxu0
        %v606 = vpop.f32.mrf.mxu0
        %v607 = vadd.f32 0.0, %v606
        %v608 = vpop.f32.mrf.mxu0
        %609 = vmatprep.mubr.bf16.mxu0 0
        %610 = vmatmul.mubr.bf16.gmra.mxu0 %v441
        %v611 = vpop.f32.mrf.mxu0
        %v612 = vadd.f32 0.0, %v611
        %v613 = vpop.f32.mrf.mxu0
        %v614 = vpop.f32.mrf.mxu0
        %v615 = vadd.f32 0.0, %v614
        %v616 = vpop.f32.mrf.mxu0
        %617 = vmatprep.mubr.bf16.mxu0 0
        %618 = vmatmul.mubr.bf16.gmra.mxu0 %v442
        %v619 = vpop.f32.mrf.mxu0
        %v620 = vadd.f32 0.0, %v619
        %v621 = vpop.f32.mrf.mxu0
        %v622 = vpop.f32.mrf.mxu0
        %v623 = vadd.f32 0.0, %v622
        %v624 = vpop.f32.mrf.mxu0
        %625 = vmatprep.mubr.bf16.mxu0 0
        %626 = vmatmul.mubr.bf16.gmra.mxu0 %v443
        %v627 = vpop.f32.mrf.mxu0
        %v628 = vadd.f32 0.0, %v627
        %v629 = vpop.f32.mrf.mxu0
        %v630 = vpop.f32.mrf.mxu0
        %v631 = vadd.f32 0.0, %v630
        %v632 = vpop.f32.mrf.mxu0
        %633 = vmatprep.mubr.bf16.mxu0 0
        %634 = vmatmul.mubr.bf16.gmra.mxu0 %v444
        %v635 = vpop.f32.mrf.mxu0
        %v636 = vadd.f32 0.0, %v635
        %v637 = vpop.f32.mrf.mxu0
        %v638 = vpop.f32.mrf.mxu0
        %v639 = vadd.f32 0.0, %v638
        %v640 = vpop.f32.mrf.mxu0
        %641 = vmatprep.mubr.bf16.mxu0 0
        %642 = vmatmul.mubr.bf16.gmra.mxu0 %v445
        %v643 = vpop.f32.mrf.mxu0
        %v644 = vadd.f32 0.0, %v643
        %v645 = vpop.f32.mrf.mxu0
        %v646 = vpop.f32.mrf.mxu0
        %v647 = vadd.f32 0.0, %v646
        %v648 = vpop.f32.mrf.mxu0
        %649 = vmatprep.mubr.bf16.mxu0 0
        %650 = vmatmul.mubr.bf16.gmra.mxu0 %v446
        %v651 = vpop.f32.mrf.mxu0
        %v652 = vadd.f32 0.0, %v651
        %v653 = vpop.f32.mrf.mxu0
        %v654 = vpop.f32.mrf.mxu0
        %v655 = vadd.f32 0.0, %v654
        %v656 = vpop.f32.mrf.mxu0
        %657 = vmatprep.mubr.bf16.mxu0 0
        %658 = vmatmul.mubr.bf16.gmra.mxu0 %v447
        %v659 = vpop.f32.mrf.mxu0
        %v660 = vadd.f32 0.0, %v659
        %v661 = vpop.f32.mrf.mxu0
        %v662 = vpop.f32.mrf.mxu0
        %v663 = vadd.f32 0.0, %v662
        %v664 = vpop.f32.mrf.mxu0
        %665 = vmatprep.mubr.bf16.mxu0 0
        %666 = vmatmul.mubr.bf16.gmra.mxu0 %v448
        %v667 = vpop.f32.mrf.mxu0
        %v668 = vadd.f32 0.0, %v667
        %v669 = vpop.f32.mrf.mxu0
        %v670 = vpop.f32.mrf.mxu0
        %v671 = vadd.f32 0.0, %v670
        %v672 = vpop.f32.mrf.mxu0
        %673 = vdwg.mxu0
        %v674 = vadd.f32 %v289, %v548
        %v675 = vadd.f32 %v290, %v551
        %v676 = vadd.f32 %v291, %v556
        %v677 = vadd.f32 %v292, %v559
        %v678 = vadd.f32 %v293, %v564
        %v679 = vadd.f32 %v294, %v567
        %v680 = vadd.f32 %v295, %v572
        %v681 = vadd.f32 %v296, %v575
        %v682 = vadd.f32 %v297, %v580
        %v683 = vadd.f32 %v298, %v583
        %v684 = vadd.f32 %v299, %v588
        %v685 = vadd.f32 %v300, %v591
        %v686 = vadd.f32 %v301, %v596
        %v687 = vadd.f32 %v302, %v599
        %v688 = vadd.f32 %v303, %v604
        %v689 = vadd.f32 %v304, %v607
        %v690 = vadd.f32 %v305, %v612
        %v691 = vadd.f32 %v306, %v615
        %v692 = vadd.f32 %v307, %v620
        %v693 = vadd.f32 %v308, %v623
        %v694 = vadd.f32 %v309, %v628
        %v695 = vadd.f32 %v310, %v631
        %v696 = vadd.f32 %v311, %v636
        %v697 = vadd.f32 %v312, %v639
        %v698 = vadd.f32 %v313, %v644
        %v699 = vadd.f32 %v314, %v647
        %v700 = vadd.f32 %v315, %v652
        %v701 = vadd.f32 %v316, %v655
        %v702 = vadd.f32 %v317, %v660
        %v703 = vadd.f32 %v318, %v663
        %v704 = vadd.f32 %v319, %v668
        %v705 = vadd.f32 %v320, %v671
        %vm706 = vcmask 130048
        %707 = vst.msk [vmem:[#allocation2] sm:$0xff] %vm706, %v674
        %708 = vst.msk [vmem:[#allocation2 + $0x8] sm:$0xff] %vm706, %v675
        %709 = vst.msk [vmem:[#allocation2 + $0x10] sm:$0xff] %vm706, %v676
        %710 = vst.msk [vmem:[#allocation2 + $0x18] sm:$0xff] %vm706, %v677
        %711 = vst.msk [vmem:[#allocation2 + $0x20] sm:$0xff] %vm706, %v678
        %712 = vst.msk [vmem:[#allocation2 + $0x28] sm:$0xff] %vm706, %v679
        %713 = vst.msk [vmem:[#allocation2 + $0x30] sm:$0xff] %vm706, %v680
        %714 = vst.msk [vmem:[#allocation2 + $0x38] sm:$0xff] %vm706, %v681
        %715 = vst.msk [vmem:[#allocation2 + $0x40] sm:$0xff] %vm706, %v682
        %716 = vst.msk [vmem:[#allocation2 + $0x48] sm:$0xff] %vm706, %v683
        %717 = vst.msk [vmem:[#allocation2 + $0x50] sm:$0xff] %vm706, %v684
        %718 = vst.msk [vmem:[#allocation2 + $0x58] sm:$0xff] %vm706, %v685
        %719 = vst.msk [vmem:[#allocation2 + $0x60] sm:$0xff] %vm706, %v686
        %720 = vst.msk [vmem:[#allocation2 + $0x68] sm:$0xff] %vm706, %v687
        %721 = vst.msk [vmem:[#allocation2 + $0x70] sm:$0xff] %vm706, %v688
        %722 = vst.msk [vmem:[#allocation2 + $0x78] sm:$0xff] %vm706, %v689
        %723 = vst.msk [vmem:[#allocation2 + $0x80] sm:$0xff] %vm706, %v690
        %724 = vst.msk [vmem:[#allocation2 + $0x88] sm:$0xff] %vm706, %v691
        %725 = vst.msk [vmem:[#allocation2 + $0x90] sm:$0xff] %vm706, %v692
        %726 = vst.msk [vmem:[#allocation2 + $0x98] sm:$0xff] %vm706, %v693
        %727 = vst.msk [vmem:[#allocation2 + $0xa0] sm:$0xff] %vm706, %v694
        %728 = vst.msk [vmem:[#allocation2 + $0xa8] sm:$0xff] %vm706, %v695
        %729 = vst.msk [vmem:[#allocation2 + $0xb0] sm:$0xff] %vm706, %v696
        %730 = vst.msk [vmem:[#allocation2 + $0xb8] sm:$0xff] %vm706, %v697
        %731 = vst.msk [vmem:[#allocation2 + $0xc0] sm:$0xff] %vm706, %v698
        %732 = vst.msk [vmem:[#allocation2 + $0xc8] sm:$0xff] %vm706, %v699
        %733 = vst.msk [vmem:[#allocation2 + $0xd0] sm:$0xff] %vm706, %v700
        %734 = vst.msk [vmem:[#allocation2 + $0xd8] sm:$0xff] %vm706, %v701
        %735 = vst.msk [vmem:[#allocation2 + $0xe0] sm:$0xff] %vm706, %v702
        %736 = vst.msk [vmem:[#allocation2 + $0xe8] sm:$0xff] %vm706, %v703
        %737 = vst.msk [vmem:[#allocation2 + $0xf0] sm:$0xff] %vm706, %v704
        %738 = vst.msk [vmem:[#allocation2 + $0xf8] sm:$0xff] %vm706, %v705
        // Predicated region
        $region41: #{tpu_custom_call.1} parent=31 // pred_check
          %p739 = pneg %p252
        $region42: #{tpu_custom_call.1} parent=31 // pred_check_branch
          %741 = sbr.rel (%p739) target = $region44
        $region43: #{tpu_custom_call.1} parent=31 // pred_region
          %v742 = vld [vmem:[#allocation2] sm:$0xff]
          %v743 = vld [vmem:[#allocation2 + $0x8] sm:$0xff]
          %v744 = vld [vmem:[#allocation2 + $0x10] sm:$0xff]
          %v745 = vld [vmem:[#allocation2 + $0x18] sm:$0xff]
          %v746 = vld [vmem:[#allocation2 + $0x20] sm:$0xff]
          %v747 = vld [vmem:[#allocation2 + $0x28] sm:$0xff]
          %v748 = vld [vmem:[#allocation2 + $0x30] sm:$0xff]
          %v749 = vld [vmem:[#allocation2 + $0x38] sm:$0xff]
          %v750 = vld [vmem:[#allocation2 + $0x40] sm:$0xff]
          %v751 = vld [vmem:[#allocation2 + $0x48] sm:$0xff]
          %v752 = vld [vmem:[#allocation2 + $0x50] sm:$0xff]
          %v753 = vld [vmem:[#allocation2 + $0x58] sm:$0xff]
          %v754 = vld [vmem:[#allocation2 + $0x60] sm:$0xff]
          %v755 = vld [vmem:[#allocation2 + $0x68] sm:$0xff]
          %v756 = vld [vmem:[#allocation2 + $0x70] sm:$0xff]
          %v757 = vld [vmem:[#allocation2 + $0x78] sm:$0xff]
          %v758 = vld [vmem:[#allocation2 + $0x80] sm:$0xff]
          %v759 = vld [vmem:[#allocation2 + $0x88] sm:$0xff]
          %v760 = vld [vmem:[#allocation2 + $0x90] sm:$0xff]
          %v761 = vld [vmem:[#allocation2 + $0x98] sm:$0xff]
          %v762 = vld [vmem:[#allocation2 + $0xa0] sm:$0xff]
          %v763 = vld [vmem:[#allocation2 + $0xa8] sm:$0xff]
          %v764 = vld [vmem:[#allocation2 + $0xb0] sm:$0xff]
          %v765 = vld [vmem:[#allocation2 + $0xb8] sm:$0xff]
          %v766 = vld [vmem:[#allocation2 + $0xc0] sm:$0xff]
          %v767 = vld [vmem:[#allocation2 + $0xc8] sm:$0xff]
          %v768 = vld [vmem:[#allocation2 + $0xd0] sm:$0xff]
          %v769 = vld [vmem:[#allocation2 + $0xd8] sm:$0xff]
          %v770 = vld [vmem:[#allocation2 + $0xe0] sm:$0xff]
          %v771 = vld [vmem:[#allocation2 + $0xe8] sm:$0xff]
          %v772 = vld [vmem:[#allocation2 + $0xf0] sm:$0xff]
          %v773 = vld [vmem:[#allocation2 + $0xf8] sm:$0xff]
          %v774 = vld [vmem:[%s2] sm:$0x1]
          %v776 = vlaneseq
          %v777 = vshrl.u32 %v776, 7
          %v778 = vsub.s32 0, %v777
          %v779 = vrot.slane %v774, %v778
          %v781 = vadd.f32 %v742, %v779
          %v782 = vadd.f32 %v743, %v779
          %v783 = vadd.f32 %v744, %v779
          %v784 = vadd.f32 %v745, %v779
          %v785 = vadd.f32 %v746, %v779
          %v786 = vadd.f32 %v747, %v779
          %v787 = vadd.f32 %v748, %v779
          %v788 = vadd.f32 %v749, %v779
          %v789 = vadd.f32 %v750, %v779
          %v790 = vadd.f32 %v751, %v779
          %v791 = vadd.f32 %v752, %v779
          %v792 = vadd.f32 %v753, %v779
          %v793 = vadd.f32 %v754, %v779
          %v794 = vadd.f32 %v755, %v779
          %v795 = vadd.f32 %v756, %v779
          %v796 = vadd.f32 %v757, %v779
          %v797 = vadd.f32 %v758, %v779
          %v798 = vadd.f32 %v759, %v779
          %v799 = vadd.f32 %v760, %v779
          %v800 = vadd.f32 %v761, %v779
          %v801 = vadd.f32 %v762, %v779
          %v802 = vadd.f32 %v763, %v779
          %v803 = vadd.f32 %v764, %v779
          %v804 = vadd.f32 %v765, %v779
          %v805 = vadd.f32 %v766, %v779
          %v806 = vadd.f32 %v767, %v779
          %v807 = vadd.f32 %v768, %v779
          %v808 = vadd.f32 %v769, %v779
          %v809 = vadd.f32 %v770, %v779
          %v810 = vadd.f32 %v771, %v779
          %v811 = vadd.f32 %v772, %v779
          %v812 = vadd.f32 %v773, %v779
          %vm813 = vcmp.ge.f32.partialorder %v781, 0.0
          %vm814 = vcmp.ge.f32.partialorder %v782, 0.0
          %vm815 = vcmp.ge.f32.partialorder %v783, 0.0
          %vm816 = vcmp.ge.f32.partialorder %v784, 0.0
          %vm817 = vcmp.ge.f32.partialorder %v785, 0.0
          %vm818 = vcmp.ge.f32.partialorder %v786, 0.0
          %vm819 = vcmp.ge.f32.partialorder %v787, 0.0
          %vm820 = vcmp.ge.f32.partialorder %v788, 0.0
          %vm821 = vcmp.ge.f32.partialorder %v789, 0.0
          %vm822 = vcmp.ge.f32.partialorder %v790, 0.0
          %vm823 = vcmp.ge.f32.partialorder %v791, 0.0
          %vm824 = vcmp.ge.f32.partialorder %v792, 0.0
          %vm825 = vcmp.ge.f32.partialorder %v793, 0.0
          %vm826 = vcmp.ge.f32.partialorder %v794, 0.0
          %vm827 = vcmp.ge.f32.partialorder %v795, 0.0
          %vm828 = vcmp.ge.f32.partialorder %v796, 0.0
          %vm829 = vcmp.ge.f32.partialorder %v797, 0.0
          %vm830 = vcmp.ge.f32.partialorder %v798, 0.0
          %vm831 = vcmp.ge.f32.partialorder %v799, 0.0
          %vm832 = vcmp.ge.f32.partialorder %v800, 0.0
          %vm833 = vcmp.ge.f32.partialorder %v801, 0.0
          %vm834 = vcmp.ge.f32.partialorder %v802, 0.0
          %vm835 = vcmp.ge.f32.partialorder %v803, 0.0
          %vm836 = vcmp.ge.f32.partialorder %v804, 0.0
          %vm837 = vcmp.ge.f32.partialorder %v805, 0.0
          %vm838 = vcmp.ge.f32.partialorder %v806, 0.0
          %vm839 = vcmp.ge.f32.partialorder %v807, 0.0
          %vm840 = vcmp.ge.f32.partialorder %v808, 0.0
          %vm841 = vcmp.ge.f32.partialorder %v809, 0.0
          %vm842 = vcmp.ge.f32.partialorder %v810, 0.0
          %vm843 = vcmp.ge.f32.partialorder %v811, 0.0
          %vm844 = vcmp.ge.f32.partialorder %v812, 0.0
          %v845 = vmul.f32 %v781, 0.1
          %v846 = vmul.f32 %v782, 0.1
          %v847 = vmul.f32 %v783, 0.1
          %v848 = vmul.f32 %v784, 0.1
          %v849 = vmul.f32 %v785, 0.1
          %v850 = vmul.f32 %v786, 0.1
          %v851 = vmul.f32 %v787, 0.1
          %v852 = vmul.f32 %v788, 0.1
          %v853 = vmul.f32 %v789, 0.1
          %v854 = vmul.f32 %v790, 0.1
          %v855 = vmul.f32 %v791, 0.1
          %v856 = vmul.f32 %v792, 0.1
          %v857 = vmul.f32 %v793, 0.1
          %v858 = vmul.f32 %v794, 0.1
          %v859 = vmul.f32 %v795, 0.1
          %v860 = vmul.f32 %v796, 0.1
          %v861 = vmul.f32 %v797, 0.1
          %v862 = vmul.f32 %v798, 0.1
          %v863 = vmul.f32 %v799, 0.1
          %v864 = vmul.f32 %v800, 0.1
          %v865 = vmul.f32 %v801, 0.1
          %v866 = vmul.f32 %v802, 0.1
          %v867 = vmul.f32 %v803, 0.1
          %v868 = vmul.f32 %v804, 0.1
          %v869 = vmul.f32 %v805, 0.1
          %v870 = vmul.f32 %v806, 0.1
          %v871 = vmul.f32 %v807, 0.1
          %v872 = vmul.f32 %v808, 0.1
          %v873 = vmul.f32 %v809, 0.1
          %v874 = vmul.f32 %v810, 0.1
          %v875 = vmul.f32 %v811, 0.1
          %v876 = vmul.f32 %v812, 0.1
          %v877 = vsel %vm813, %v781, %v845
          %v878 = vsel %vm814, %v782, %v846
          %v879 = vsel %vm815, %v783, %v847
          %v880 = vsel %vm816, %v784, %v848
          %v881 = vsel %vm817, %v785, %v849
          %v882 = vsel %vm818, %v786, %v850
          %v883 = vsel %vm819, %v787, %v851
          %v884 = vsel %vm820, %v788, %v852
          %v885 = vsel %vm821, %v789, %v853
          %v886 = vsel %vm822, %v790, %v854
          %v887 = vsel %vm823, %v791, %v855
          %v888 = vsel %vm824, %v792, %v856
          %v889 = vsel %vm825, %v793, %v857
          %v890 = vsel %vm826, %v794, %v858
          %v891 = vsel %vm827, %v795, %v859
          %v892 = vsel %vm828, %v796, %v860
          %v893 = vsel %vm829, %v797, %v861
          %v894 = vsel %vm830, %v798, %v862
          %v895 = vsel %vm831, %v799, %v863
          %v896 = vsel %vm832, %v800, %v864
          %v897 = vsel %vm833, %v801, %v865
          %v898 = vsel %vm834, %v802, %v866
          %v899 = vsel %vm835, %v803, %v867
          %v900 = vsel %vm836, %v804, %v868
          %v901 = vsel %vm837, %v805, %v869
          %v902 = vsel %vm838, %v806, %v870
          %v903 = vsel %vm839, %v807, %v871
          %v904 = vsel %vm840, %v808, %v872
          %v905 = vsel %vm841, %v809, %v873
          %v906 = vsel %vm842, %v810, %v874
          %v907 = vsel %vm843, %v811, %v875
          %v908 = vsel %vm844, %v812, %v876
          %v909 = vpack.c.bf16 %v878, %v877
          %v910 = vpack.c.bf16 %v880, %v879
          %v911 = vpack.c.bf16 %v882, %v881
          %v912 = vpack.c.bf16 %v884, %v883
          %v913 = vpack.c.bf16 %v886, %v885
          %v914 = vpack.c.bf16 %v888, %v887
          %v915 = vpack.c.bf16 %v890, %v889
          %v916 = vpack.c.bf16 %v892, %v891
          %v917 = vpack.c.bf16 %v894, %v893
          %v918 = vpack.c.bf16 %v896, %v895
          %v919 = vpack.c.bf16 %v898, %v897
          %v920 = vpack.c.bf16 %v900, %v899
          %v921 = vpack.c.bf16 %v902, %v901
          %v922 = vpack.c.bf16 %v904, %v903
          %v923 = vpack.c.bf16 %v906, %v905
          %v924 = vpack.c.bf16 %v908, %v907
          %v941 = vunpack.c.l.b16 %v909
          %v942 = vunpack.c.h.b16 %v909
          %v943 = vunpack.c.l.b16 %v910
          %v944 = vunpack.c.h.b16 %v910
          %v945 = vunpack.c.l.b16 %v911
          %v946 = vunpack.c.h.b16 %v911
          %v947 = vunpack.c.l.b16 %v912
          %v948 = vunpack.c.h.b16 %v912
          %v949 = vunpack.c.l.b16 %v913
          %v950 = vunpack.c.h.b16 %v913
          %v951 = vunpack.c.l.b16 %v914
          %v952 = vunpack.c.h.b16 %v914
          %v953 = vunpack.c.l.b16 %v915
          %v954 = vunpack.c.h.b16 %v915
          %v955 = vunpack.c.l.b16 %v916
          %v956 = vunpack.c.h.b16 %v916
          %v957 = vunpack.c.l.b16 %v917
          %v958 = vunpack.c.h.b16 %v917
          %v959 = vunpack.c.l.b16 %v918
          %v960 = vunpack.c.h.b16 %v918
          %v961 = vunpack.c.l.b16 %v919
          %v962 = vunpack.c.h.b16 %v919
          %v963 = vunpack.c.l.b16 %v920
          %v964 = vunpack.c.h.b16 %v920
          %v965 = vunpack.c.l.b16 %v921
          %v966 = vunpack.c.h.b16 %v921
          %v967 = vunpack.c.l.b16 %v922
          %v968 = vunpack.c.h.b16 %v922
          %v969 = vunpack.c.l.b16 %v923
          %v970 = vunpack.c.h.b16 %v923
          %v971 = vunpack.c.l.b16 %v924
          %v972 = vunpack.c.h.b16 %v924
          %v973 = vpack.c.b16 %v941, %v941
          %v974 = vpack.c.b16 %v942, %v942
          %v975 = vpack.c.b16 %v943, %v943
          %v976 = vpack.c.b16 %v944, %v944
          %v977 = vpack.c.b16 %v945, %v945
          %v978 = vpack.c.b16 %v946, %v946
          %v979 = vpack.c.b16 %v947, %v947
          %v980 = vpack.c.b16 %v948, %v948
          %v981 = vpack.c.b16 %v949, %v949
          %v982 = vpack.c.b16 %v950, %v950
          %v983 = vpack.c.b16 %v951, %v951
          %v984 = vpack.c.b16 %v952, %v952
          %v985 = vpack.c.b16 %v953, %v953
          %v986 = vpack.c.b16 %v954, %v954
          %v987 = vpack.c.b16 %v955, %v955
          %v988 = vpack.c.b16 %v956, %v956
          %v989 = vpack.c.b16 %v957, %v957
          %v990 = vpack.c.b16 %v958, %v958
          %v991 = vpack.c.b16 %v959, %v959
          %v992 = vpack.c.b16 %v960, %v960
          %v993 = vpack.c.b16 %v961, %v961
          %v994 = vpack.c.b16 %v962, %v962
          %v995 = vpack.c.b16 %v963, %v963
          %v996 = vpack.c.b16 %v964, %v964
          %v997 = vpack.c.b16 %v965, %v965
          %v998 = vpack.c.b16 %v966, %v966
          %v999 = vpack.c.b16 %v967, %v967
          %v1000 = vpack.c.b16 %v968, %v968
          %v1001 = vpack.c.b16 %v969, %v969
          %v1002 = vpack.c.b16 %v970, %v970
          %v1003 = vpack.c.b16 %v971, %v971
          %v1004 = vpack.c.b16 %v972, %v972
          %vm1037 = vcmask 125952
          %1038 = vst.msk [vmem:[%s249] sm:$0xf] %vm1037, %v973
          %1039 = vst.msk [vmem:[%s249 + $0x4] sm:$0xf] %vm1037, %v974
          %1040 = vst.msk [vmem:[%s249 + $0x8] sm:$0xf] %vm1037, %v975
          %1041 = vst.msk [vmem:[%s249 + $0xc] sm:$0xf] %vm1037, %v976
          %1042 = vst.msk [vmem:[%s249 + $0x10] sm:$0xf] %vm1037, %v977
          %1043 = vst.msk [vmem:[%s249 + $0x14] sm:$0xf] %vm1037, %v978
          %1044 = vst.msk [vmem:[%s249 + $0x18] sm:$0xf] %vm1037, %v979
          %1045 = vst.msk [vmem:[%s249 + $0x1c] sm:$0xf] %vm1037, %v980
          %1046 = vst.msk [vmem:[%s249 + $0x20] sm:$0xf] %vm1037, %v981
          %1047 = vst.msk [vmem:[%s249 + $0x24] sm:$0xf] %vm1037, %v982
          %1048 = vst.msk [vmem:[%s249 + $0x28] sm:$0xf] %vm1037, %v983
          %1049 = vst.msk [vmem:[%s249 + $0x2c] sm:$0xf] %vm1037, %v984
          %1050 = vst.msk [vmem:[%s249 + $0x30] sm:$0xf] %vm1037, %v985
          %1051 = vst.msk [vmem:[%s249 + $0x34] sm:$0xf] %vm1037, %v986
          %1052 = vst.msk [vmem:[%s249 + $0x38] sm:$0xf] %vm1037, %v987
          %1053 = vst.msk [vmem:[%s249 + $0x3c] sm:$0xf] %vm1037, %v988
          %1054 = vst.msk [vmem:[%s249 + $0x40] sm:$0xf] %vm1037, %v989
          %1055 = vst.msk [vmem:[%s249 + $0x44] sm:$0xf] %vm1037, %v990
          %1056 = vst.msk [vmem:[%s249 + $0x48] sm:$0xf] %vm1037, %v991
          %1057 = vst.msk [vmem:[%s249 + $0x4c] sm:$0xf] %vm1037, %v992
          %1058 = vst.msk [vmem:[%s249 + $0x50] sm:$0xf] %vm1037, %v993
          %1059 = vst.msk [vmem:[%s249 + $0x54] sm:$0xf] %vm1037, %v994
          %1060 = vst.msk [vmem:[%s249 + $0x58] sm:$0xf] %vm1037, %v995
          %1061 = vst.msk [vmem:[%s249 + $0x5c] sm:$0xf] %vm1037, %v996
          %1062 = vst.msk [vmem:[%s249 + $0x60] sm:$0xf] %vm1037, %v997
          %1063 = vst.msk [vmem:[%s249 + $0x64] sm:$0xf] %vm1037, %v998
          %1064 = vst.msk [vmem:[%s249 + $0x68] sm:$0xf] %vm1037, %v999
          %1065 = vst.msk [vmem:[%s249 + $0x6c] sm:$0xf] %vm1037, %v1000
          %1066 = vst.msk [vmem:[%s249 + $0x70] sm:$0xf] %vm1037, %v1001
          %1067 = vst.msk [vmem:[%s249 + $0x74] sm:$0xf] %vm1037, %v1002
          %1068 = vst.msk [vmem:[%s249 + $0x78] sm:$0xf] %vm1037, %v1003
          %1069 = vst.msk [vmem:[%s249 + $0x7c] sm:$0xf] %vm1037, %v1004
        $region44: #{tpu_custom_call.1} parent=31 // pred_fallthru
          _
        %s1070 = smul.u32 32, %s23
        %p1071 = scmp.lt.s32.totalorder %s22, 0
        %s1072 = scalar_select %p1071, %s22, 0
        %p1073 = scmp.lt.s32.totalorder %s1070, 255
        %s1074 = scalar_select %p1073, %s1070, 255
        %s1075 = smul.addr %s1072, 256
        %s1076 = sadd.s32 %s1074, %s1075
        %s1077 = smul.addr %s1076, 4
        %s1078 = scalar_lea.vmem %s3, %s1077
        // Predicated region
        $region45: #{tpu_custom_call.1} parent=31 // pred_check
          %p1079 = pneg %p133
        $region46: #{tpu_custom_call.1} parent=31 // pred_check_branch
          %1081 = sbr.rel (%p1079) target = $region48
        $region47: #{tpu_custom_call.1} parent=31 // pred_region
          %s1082 = smul.u32 32, %s23
        $region48: #{tpu_custom_call.1} parent=31 // pred_fallthru
          _
      $region32: #{tpu_custom_call.1} parent=5 // pred_fallthru
        _
      %p1083 = scmp.le.s32.totalorder 2, %s12
      // Predicated region
      $region49: #{tpu_custom_call.1} parent=5 // pred_check
        %p1084 = pneg %p1083
      $region50: #{tpu_custom_call.1} parent=5 // pred_check_branch
        %1086 = sbr.rel (%p1084) target = $region52
      $region51: #{tpu_custom_call.1} parent=5 // pred_region
        %s1087 = ssub.s32 %s12, 2
        // Predicated region
        $region53: #{tpu_custom_call.1} parent=51 // pred_check
          %p1088 = pneg %p139
        $region54: #{tpu_custom_call.1} parent=51 // pred_check_branch
          %1090 = sbr.rel (%p1088) target = $region56
        $region55: #{tpu_custom_call.1} parent=51 // pred_region
          %s1091 = smul.u32 32, %s26
          %p1092 = scmp.lt.s32.totalorder %s25, 0
          %s1093 = scalar_select %p1092, %s25, 0
          %p1094 = scmp.lt.s32.totalorder %s1091, 255
          %s1095 = scalar_select %p1094, %s1091, 255
          %s1096 = smul.addr %s1093, 256
          %s1097 = sadd.s32 %s1095, %s1096
          %s1098 = smul.addr %s1097, 4
          %s1099 = scalar_lea.vmem %s3, %s1098
        $region56: #{tpu_custom_call.1} parent=51 // pred_fallthru
          _
      $region52: #{tpu_custom_call.1} parent=5 // pred_fallthru
        _
    $region6: #{tpu_custom_call.1} parent=1 // loop_footer
      %s16 = sadd.s32 1, %s12
    $region7: #{tpu_custom_call.1} parent=1 // loop_footer_branch
      %11 = sbr.rel target = $region3
    $region8: #{tpu_custom_call.1} parent=1 // loop_exit
      _
    %1100 = vsyncpa [#allocation4], 1
    %s1101 = scalar_lea.sflag [#allocation4], 1
    %1102 = vsyncpa %s1101, 1

</llo_original>
